<compile_context>
chip_gen: v5e
topology: v5e:2x2
jax: 0.10.0
libtpu: 0.0.40
codegen_flags: <defaults>
</compile_context>

<pallas_src>
import functools

import jax
import jax.numpy as jnp
from jax.experimental import pallas as pl
from jax.experimental.pallas import tpu as pltpu


def _round_up(x: int, m: int) -> int:
    return ((x + m - 1) // m) * m


def _pad2d(a, rows, cols):
    """Zero-pad a 2-D array to (rows, cols)."""
    r, c = a.shape
    if r == rows and c == cols:
        return a
    return jnp.pad(a, ((0, rows - r), (0, cols - c)))


def _mlp_kernel(x_ref, w0_ref, b0_ref, w1_ref, b1_ref, w2_ref, b2_ref,
                wc_ref, bc_ref, out_ref):
    """Fused forward for one batch tile.

    x_ref:   (TILE_M, F_PAD)     bf16  (pipelined over the batch grid)
    wX_ref:  (in_pad, out_pad)   bf16  (resident in VMEM across grid steps)
    bX_ref:  (1, out_pad)        f32
    out_ref: (TILE_M, C_PAD)     f32   (lane-dense, padded classifier width)
    """
    h = x_ref[...]                                                      # bf16
    # Hidden layers: bf16 MXU matmul, f32 accumulate, f32 bias-add + tanh.
    h = jnp.tanh(jnp.dot(h, w0_ref[...],
                         preferred_element_type=jnp.float32) + b0_ref[...])
    h = jnp.tanh(jnp.dot(h.astype(jnp.bfloat16), w1_ref[...],
                         preferred_element_type=jnp.float32) + b1_ref[...])
    h = jnp.tanh(jnp.dot(h.astype(jnp.bfloat16), w2_ref[...],
                         preferred_element_type=jnp.float32) + b2_ref[...])
    # Classifier (lane-dense padded width -> unmasked stores).
    out = jnp.dot(h.astype(jnp.bfloat16), wc_ref[...],
                  preferred_element_type=jnp.float32) + bc_ref[...]
    out_ref[...] = out.astype(out_ref.dtype)


@functools.partial(jax.jit, static_argnames=("num_classes", "tile_m"))
def linear_net_forward(x_nchw, params, num_classes, tile_m=256):
    """Runs LinearNet.forward. x_nchw: (N, C, H, W) float32. Returns (N, num_classes) f32."""
    n = x_nchw.shape[0]
    x2d = x_nchw.reshape(n, -1)                     # nn.Flatten() (row-major, matches torch)
    num_features = x2d.shape[1]

    (w0, b0), (w1, b1), (w2, b2), (wc, bc) = params
    h0, h1, h2 = w0.shape[1], w1.shape[1], w2.shape[1]

    # --- lane-aligned (multiple-of-128) padding of every contraction / output dim ---
    f_pad  = _round_up(num_features, 128)
    h0_pad = _round_up(h0, 128)
    h1_pad = _round_up(h1, 128)
    h2_pad = _round_up(h2, 128)
    c_pad  = _round_up(max(num_classes, 1), 128)

    # Zero padding keeps the math exact: padded input cols hit zero weight rows,
    # padded hidden units get bias 0 -> tanh(0) = 0 -> multiply zero rows downstream.
    w0_p = _pad2d(w0, f_pad,  h0_pad).astype(jnp.bfloat16)
    w1_p = _pad2d(w1, h0_pad, h1_pad).astype(jnp.bfloat16)
    w2_p = _pad2d(w2, h1_pad, h2_pad).astype(jnp.bfloat16)
    wc_p = _pad2d(wc, h2_pad, c_pad ).astype(jnp.bfloat16)
    b0_p = _pad2d(b0, 1, h0_pad)
    b1_p = _pad2d(b1, 1, h1_pad)
    b2_p = _pad2d(b2, 1, h2_pad)
    bc_p = _pad2d(bc, 1, c_pad)

    # --- input: bf16 operands, feature dim padded to f_pad ---
    x2d = _pad2d(x2d, n, f_pad).astype(jnp.bfloat16)

    # --- batch tiling: sublane-aligned tile, padded batch, 1-D grid ---
    tile = min(tile_m, _round_up(n, 8))             # small demo batches stay small
    n_pad = _round_up(n, tile)
    if n_pad != n:
        x2d = jnp.pad(x2d, ((0, n_pad - n), (0, 0)))
    grid = (n_pad // tile,)

    def resident(shape):
        # Same block index every grid step -> stays in VMEM, not re-DMA'd.
        return pl.BlockSpec(shape, lambda i: (0, 0))

    in_specs = [
        pl.BlockSpec((tile, f_pad), lambda i: (i, 0)),   # x tile (auto double-buffered)
        resident(w0_p.shape), resident(b0_p.shape),
        resident(w1_p.shape), resident(b1_p.shape),
        resident(w2_p.shape), resident(b2_p.shape),
        resident(wc_p.shape), resident(bc_p.shape),
    ]
    out_spec = pl.BlockSpec((tile, c_pad), lambda i: (i, 0))

    # Scheduling hint for XLA around the custom call.
    flops = 2 * n_pad * (f_pad * h0_pad + h0_pad * h1_pad
                         + h1_pad * h2_pad + h2_pad * c_pad)
    transcendentals = n_pad * (h0_pad + h1_pad + h2_pad)
    bytes_accessed = (x2d.size * 2
                      + (w0_p.size + w1_p.size + w2_p.size + wc_p.size) * 2
                      + (b0_p.size + b1_p.size + b2_p.size + bc_p.size) * 4
                      + n_pad * c_pad * 4)

    out = pl.pallas_call(
        _mlp_kernel,
        out_shape=jax.ShapeDtypeStruct((n_pad, c_pad), jnp.float32),
        grid=grid,
        in_specs=in_specs,
        out_specs=out_spec,
        compiler_params=pltpu.CompilerParams(
            dimension_semantics=("parallel",)),
        cost_estimate=pl.CostEstimate(
            flops=flops,
            transcendentals=transcendentals,
            bytes_accessed=bytes_accessed),
    )(x2d, w0_p, b0_p, w1_p, b1_p, w2_p, b2_p, wc_p, bc_p)

    return out[:n, :num_classes]


def init_linear(key, fan_in, fan_out):
    """Mimics torch.nn.Linear default init: U(-1/sqrt(fan_in), 1/sqrt(fan_in)).

    Weight stored as (fan_in, fan_out) (transposed vs. PyTorch's (out, in)),
    bias as (1, fan_out) for in-kernel broadcast.
    """
    kw, kb = jax.random.split(key)
    bound = 1.0 / (fan_in ** 0.5)
    w = jax.random.uniform(kw, (fan_in, fan_out), jnp.float32, -bound, bound)
    b = jax.random.uniform(kb, (1, fan_out), jnp.float32, -bound, bound)
    return w, b


def make_params(key, num_features, num_classes, hidden_layer_sizes=(128, 256, 128)):
    keys = jax.random.split(key, len(hidden_layer_sizes) + 1)
    params = []
    prev = num_features
    for i, h in enumerate(hidden_layer_sizes):
        params.append(init_linear(keys[i], prev, h))
        prev = h
    params.append(init_linear(keys[-1], prev, num_classes))
    return tuple(params)


def reference_forward_matched(x_nchw, params):
    """Pure-JAX reference matching the kernel's dtype path (bf16 operands, f32 accum)."""
    n = x_nchw.shape[0]
    h = x_nchw.reshape(n, -1).astype(jnp.bfloat16)
    (w0, b0), (w1, b1), (w2, b2), (wc, bc) = params
    for w, b in ((w0, b0), (w1, b1), (w2, b2)):
        pre = jnp.dot(h, w.astype(jnp.bfloat16), preferred_element_type=jnp.float32) + b
        h = jnp.tanh(pre).astype(jnp.bfloat16)
    return jnp.dot(h, wc.astype(jnp.bfloat16), preferred_element_type=jnp.float32) + bc


def reference_forward_f32(x_nchw, params):
    """Full-precision reference of the original module semantics."""
    n = x_nchw.shape[0]
    h = x_nchw.reshape(n, -1)
    (w0, b0), (w1, b1), (w2, b2), (wc, bc) = params
    h = jnp.tanh(h @ w0 + b0)
    h = jnp.tanh(h @ w1 + b1)
    h = jnp.tanh(h @ w2 + b2)
    return h @ wc + bc


if __name__ == "__main__":
    # Small image-classification-like shapes: batch=2, C=4, H=W=16 -> num_features=1024.
    batch, c, hgt, wid = 2, 4, 16, 16
    num_features = c * hgt * wid
    num_classes = 10

    key = jax.random.PRNGKey(0)
    kx, kp = jax.random.split(key)
    x = jax.random.normal(kx, (batch, c, hgt, wid), jnp.float32)
    params = make_params(kp, num_features, num_classes)

    out = linear_net_forward(x, params, num_classes)
    out = jax.block_until_ready(out)
    assert out.shape == (batch, num_classes)

    # Tight check vs. a reference that follows the same bf16/f32 dtype path.
    ref_bf16 = reference_forward_matched(x, params)
    assert jnp.allclose(out, ref_bf16, atol=1e-2, rtol=1e-2), "mismatch vs matched-dtype reference"

    # Loose check vs. the full-f32 module semantics (bf16 weight rounding only).
    ref_f32 = reference_forward_f32(x, params)
    assert jnp.allclose(out, ref_f32, atol=2e-1, rtol=1e-1), "mismatch vs f32 reference"

    print("KERNEL_OK")
</pallas_src>

<mosaic_0001>
module attributes {stable_mosaic.version = 11 : i64} {
  func.func @_mlp_kernel(%arg0: i32, %arg1: memref<8x1024xbf16, #tpu.memory_space<vmem>>, %arg2: memref<1024x128xbf16, #tpu.memory_space<vmem>>, %arg3: memref<1x128xf32, #tpu.memory_space<vmem>>, %arg4: memref<128x256xbf16, #tpu.memory_space<vmem>>, %arg5: memref<1x256xf32, #tpu.memory_space<vmem>>, %arg6: memref<256x128xbf16, #tpu.memory_space<vmem>>, %arg7: memref<1x128xf32, #tpu.memory_space<vmem>>, %arg8: memref<128x128xbf16, #tpu.memory_space<vmem>>, %arg9: memref<1x128xf32, #tpu.memory_space<vmem>>, %arg10: memref<8x128xf32, #tpu.memory_space<vmem>>) attributes {dimension_semantics = [#tpu.dimension_semantics<parallel>], iteration_bounds = array<i64: 1>, scalar_prefetch = 0 : i64, scratch_operands = 0 : i64, tpu.core_type = #tpu.core_type<tc>, window_params = [{transform_indices = @transform_0, window_bounds = array<i64: 8, 1024>}, {pipeline_mode = #tpu.pipeline_mode<synchronous>, transform_indices = @transform_1, window_bounds = array<i64: 1024, 128>}, {pipeline_mode = #tpu.pipeline_mode<synchronous>, transform_indices = @transform_2, window_bounds = array<i64: 1, 128>}, {pipeline_mode = #tpu.pipeline_mode<synchronous>, transform_indices = @transform_3, window_bounds = array<i64: 128, 256>}, {pipeline_mode = #tpu.pipeline_mode<synchronous>, transform_indices = @transform_4, window_bounds = array<i64: 1, 256>}, {pipeline_mode = #tpu.pipeline_mode<synchronous>, transform_indices = @transform_5, window_bounds = array<i64: 256, 128>}, {pipeline_mode = #tpu.pipeline_mode<synchronous>, transform_indices = @transform_6, window_bounds = array<i64: 1, 128>}, {pipeline_mode = #tpu.pipeline_mode<synchronous>, transform_indices = @transform_7, window_bounds = array<i64: 128, 128>}, {pipeline_mode = #tpu.pipeline_mode<synchronous>, transform_indices = @transform_8, window_bounds = array<i64: 1, 128>}, {transform_indices = @transform_9, window_bounds = array<i64: 8, 128>}]} {
    %c0 = arith.constant 0 : index
    %c0_0 = arith.constant 0 : index
    %0 = vector.load %arg1[%c0, %c0_0] : memref<8x1024xbf16, #tpu.memory_space<vmem>>, vector<8x1024xbf16>
    %c0_1 = arith.constant 0 : index
    %c0_2 = arith.constant 0 : index
    %1 = vector.load %arg2[%c0_1, %c0_2] : memref<1024x128xbf16, #tpu.memory_space<vmem>>, vector<1024x128xbf16>
    %cst = arith.constant dense<0.000000e+00> : vector<8x128xf32>
    %2 = tpu.matmul %0, %1, %cst {dimension_numbers = #tpu.dot_dimension_numbers<[1], [0], [0], [1], [0, 0, 1, 1], [], []>} : vector<8x1024xbf16>, vector<1024x128xbf16>, vector<8x128xf32> -> vector<8x128xf32>
    %c0_3 = arith.constant 0 : index
    %c0_4 = arith.constant 0 : index
    %3 = vector.load %arg3[%c0_3, %c0_4] : memref<1x128xf32, #tpu.memory_space<vmem>>, vector<1x128xf32>
    %4 = vector.broadcast %3 : vector<1x128xf32> to vector<8x128xf32>
    %5 = arith.addf %2, %4 : vector<8x128xf32>
    %6 = math.tanh %5 : vector<8x128xf32>
    %7 = arith.truncf %6 : vector<8x128xf32> to vector<8x128xbf16>
    %c0_5 = arith.constant 0 : index
    %c0_6 = arith.constant 0 : index
    %8 = vector.load %arg4[%c0_5, %c0_6] : memref<128x256xbf16, #tpu.memory_space<vmem>>, vector<128x256xbf16>
    %cst_7 = arith.constant dense<0.000000e+00> : vector<8x256xf32>
    %9 = tpu.matmul %7, %8, %cst_7 {dimension_numbers = #tpu.dot_dimension_numbers<[1], [0], [0], [1], [0, 0, 1, 1], [], []>} : vector<8x128xbf16>, vector<128x256xbf16>, vector<8x256xf32> -> vector<8x256xf32>
    %c0_8 = arith.constant 0 : index
    %c0_9 = arith.constant 0 : index
    %10 = vector.load %arg5[%c0_8, %c0_9] : memref<1x256xf32, #tpu.memory_space<vmem>>, vector<1x256xf32>
    %11 = vector.broadcast %10 : vector<1x256xf32> to vector<8x256xf32>
    %12 = arith.addf %9, %11 : vector<8x256xf32>
    %13 = math.tanh %12 : vector<8x256xf32>
    %14 = arith.truncf %13 : vector<8x256xf32> to vector<8x256xbf16>
    %c0_10 = arith.constant 0 : index
    %c0_11 = arith.constant 0 : index
    %15 = vector.load %arg6[%c0_10, %c0_11] : memref<256x128xbf16, #tpu.memory_space<vmem>>, vector<256x128xbf16>
    %cst_12 = arith.constant dense<0.000000e+00> : vector<8x128xf32>
    %16 = tpu.matmul %14, %15, %cst_12 {dimension_numbers = #tpu.dot_dimension_numbers<[1], [0], [0], [1], [0, 0, 1, 1], [], []>} : vector<8x256xbf16>, vector<256x128xbf16>, vector<8x128xf32> -> vector<8x128xf32>
    %c0_13 = arith.constant 0 : index
    %c0_14 = arith.constant 0 : index
    %17 = vector.load %arg7[%c0_13, %c0_14] : memref<1x128xf32, #tpu.memory_space<vmem>>, vector<1x128xf32>
    %18 = vector.broadcast %17 : vector<1x128xf32> to vector<8x128xf32>
    %19 = arith.addf %16, %18 : vector<8x128xf32>
    %20 = math.tanh %19 : vector<8x128xf32>
    %21 = arith.truncf %20 : vector<8x128xf32> to vector<8x128xbf16>
    %c0_15 = arith.constant 0 : index
    %c0_16 = arith.constant 0 : index
    %22 = vector.load %arg8[%c0_15, %c0_16] : memref<128x128xbf16, #tpu.memory_space<vmem>>, vector<128x128xbf16>
    %cst_17 = arith.constant dense<0.000000e+00> : vector<8x128xf32>
    %23 = tpu.matmul %21, %22, %cst_17 {dimension_numbers = #tpu.dot_dimension_numbers<[1], [0], [0], [1], [0, 0, 1, 1], [], []>} : vector<8x128xbf16>, vector<128x128xbf16>, vector<8x128xf32> -> vector<8x128xf32>
    %c0_18 = arith.constant 0 : index
    %c0_19 = arith.constant 0 : index
    %24 = vector.load %arg9[%c0_18, %c0_19] : memref<1x128xf32, #tpu.memory_space<vmem>>, vector<1x128xf32>
    %25 = vector.broadcast %24 : vector<1x128xf32> to vector<8x128xf32>
    %26 = arith.addf %23, %25 : vector<8x128xf32>
    %c0_20 = arith.constant 0 : index
    %c0_21 = arith.constant 0 : index
    %27 = vector.load %arg10[%c0_20, %c0_21] : memref<8x128xf32, #tpu.memory_space<vmem>>, vector<8x128xf32>
    tpu.vector_store %arg10[%c0_20, %c0_21], %26 {strides = array<i32>} : memref<8x128xf32, #tpu.memory_space<vmem>>, vector<8x128xf32>,
    return
  }
  func.func @transform_0(%arg0: i32) -> (i32, i32) {
    %c0_i32 = arith.constant 0 : i32
    %c0_i32_0 = arith.constant 0 : i32
    return %arg0, %c0_i32 : i32, i32
  }
  func.func @transform_1(%arg0: i32) -> (i32, i32) {
    %c0_i32 = arith.constant 0 : i32
    %c0_i32_0 = arith.constant 0 : i32
    %c0_i32_1 = arith.constant 0 : i32
    return %c0_i32, %c0_i32_0 : i32, i32
  }
  func.func @transform_2(%arg0: i32) -> (i32, i32) {
    %c0_i32 = arith.constant 0 : i32
    %c0_i32_0 = arith.constant 0 : i32
    %c0_i32_1 = arith.constant 0 : i32
    return %c0_i32, %c0_i32_0 : i32, i32
  }
  func.func @transform_3(%arg0: i32) -> (i32, i32) {
    %c0_i32 = arith.constant 0 : i32
    %c0_i32_0 = arith.constant 0 : i32
    %c0_i32_1 = arith.constant 0 : i32
    return %c0_i32, %c0_i32_0 : i32, i32
  }
  func.func @transform_4(%arg0: i32) -> (i32, i32) {
    %c0_i32 = arith.constant 0 : i32
    %c0_i32_0 = arith.constant 0 : i32
    %c0_i32_1 = arith.constant 0 : i32
    return %c0_i32, %c0_i32_0 : i32, i32
  }
  func.func @transform_5(%arg0: i32) -> (i32, i32) {
    %c0_i32 = arith.constant 0 : i32
    %c0_i32_0 = arith.constant 0 : i32
    %c0_i32_1 = arith.constant 0 : i32
    return %c0_i32, %c0_i32_0 : i32, i32
  }
  func.func @transform_6(%arg0: i32) -> (i32, i32) {
    %c0_i32 = arith.constant 0 : i32
    %c0_i32_0 = arith.constant 0 : i32
    %c0_i32_1 = arith.constant 0 : i32
    return %c0_i32, %c0_i32_0 : i32, i32
  }
  func.func @transform_7(%arg0: i32) -> (i32, i32) {
    %c0_i32 = arith.constant 0 : i32
    %c0_i32_0 = arith.constant 0 : i32
    %c0_i32_1 = arith.constant 0 : i32
    return %c0_i32, %c0_i32_0 : i32, i32
  }
  func.func @transform_8(%arg0: i32) -> (i32, i32) {
    %c0_i32 = arith.constant 0 : i32
    %c0_i32_0 = arith.constant 0 : i32
    %c0_i32_1 = arith.constant 0 : i32
    return %c0_i32, %c0_i32_0 : i32, i32
  }
  func.func @transform_9(%arg0: i32) -> (i32, i32) {
    %c0_i32 = arith.constant 0 : i32
    %c0_i32_0 = arith.constant 0 : i32
    return %arg0, %c0_i32 : i32, i32
  }
}

</mosaic_0001>

<llo_original>
// kernel: linear_net_forward.1
$region0: #{linear_net_forward.1}
  #allocation0 [shape = 'u32[]', space=smem, size = 0x4, offset = 0x4, fixed_abs, tag = 'smem constant byte address 0x4 - core index']
  #allocation1 [shape = 'u32[72,128]{1,0:T(1,128)}', space=vmem, size = 0x9000, scoped, tag = 'internal scratch']
  %s0 = inlined_call_operand.vmem [shape: bf16[8,1024], index: 0, kind: input, shape index: {}]
  %s1 = inlined_call_operand.vmem [shape: bf16[1024,128], index: 1, kind: input, shape index: {}]
  %s2 = inlined_call_operand.vmem [shape: f32[1,128], index: 2, kind: input, shape index: {}]
  %s3 = inlined_call_operand.vmem [shape: bf16[128,256], index: 3, kind: input, shape index: {}]
  %s4 = inlined_call_operand.vmem [shape: f32[1,256], index: 4, kind: input, shape index: {}]
  %s5 = inlined_call_operand.vmem [shape: bf16[256,128], index: 5, kind: input, shape index: {}]
  %s6 = inlined_call_operand.vmem [shape: f32[1,128], index: 6, kind: input, shape index: {}]
  %s7 = inlined_call_operand.vmem [shape: bf16[128,128], index: 7, kind: input, shape index: {}]
  %s8 = inlined_call_operand.vmem [shape: f32[1,128], index: 8, kind: input, shape index: {}]
  %s9 = inlined_call_operand.vmem [shape: f32[8,128], index: 9, kind: output, shape index: {}]
  %s10 = sld [smem:[#allocation0]]
  $region46: #{linear_net_forward.1} parent=0
    _
  %s12 = ssub.s32 1, %s10
  %s13 = scalar_select 0, %s12, %s10
  // Predicated region
  $region2: #{linear_net_forward.1} parent=0 // pred_check
    _
  $region3: #{linear_net_forward.1} parent=0 // pred_check_branch
    %15 = sbr.rel (0) target = $region5
  $region4: #{linear_net_forward.1} parent=0 // pred_region
    _
  $region5: #{linear_net_forward.1} parent=0 // pred_fallthru
    _
  // Predicated region
  $region6: #{linear_net_forward.1} parent=0 // pred_check
    _
  $region7: #{linear_net_forward.1} parent=0 // pred_check_branch
    %17 = sbr.rel (0) target = $region9
  $region8: #{linear_net_forward.1} parent=0 // pred_region
    _
  $region9: #{linear_net_forward.1} parent=0 // pred_fallthru
    _
  // Predicated region
  $region10: #{linear_net_forward.1} parent=0 // pred_check
    _
  $region11: #{linear_net_forward.1} parent=0 // pred_check_branch
    %19 = sbr.rel (0) target = $region13
  $region12: #{linear_net_forward.1} parent=0 // pred_region
    _
  $region13: #{linear_net_forward.1} parent=0 // pred_fallthru
    _
  // Predicated region
  $region14: #{linear_net_forward.1} parent=0 // pred_check
    _
  $region15: #{linear_net_forward.1} parent=0 // pred_check_branch
    %21 = sbr.rel (0) target = $region17
  $region16: #{linear_net_forward.1} parent=0 // pred_region
    _
  $region17: #{linear_net_forward.1} parent=0 // pred_fallthru
    _
  // Predicated region
  $region18: #{linear_net_forward.1} parent=0 // pred_check
    _
  $region19: #{linear_net_forward.1} parent=0 // pred_check_branch
    %23 = sbr.rel (0) target = $region21
  $region20: #{linear_net_forward.1} parent=0 // pred_region
    _
  $region21: #{linear_net_forward.1} parent=0 // pred_fallthru
    _
  // Predicated region
  $region22: #{linear_net_forward.1} parent=0 // pred_check
    _
  $region23: #{linear_net_forward.1} parent=0 // pred_check_branch
    %25 = sbr.rel (0) target = $region25
  $region24: #{linear_net_forward.1} parent=0 // pred_region
    _
  $region25: #{linear_net_forward.1} parent=0 // pred_fallthru
    _
  // Predicated region
  $region26: #{linear_net_forward.1} parent=0 // pred_check
    _
  $region27: #{linear_net_forward.1} parent=0 // pred_check_branch
    %27 = sbr.rel (0) target = $region29
  $region28: #{linear_net_forward.1} parent=0 // pred_region
    _
  $region29: #{linear_net_forward.1} parent=0 // pred_fallthru
    _
  // Predicated region
  $region30: #{linear_net_forward.1} parent=0 // pred_check
    _
  $region31: #{linear_net_forward.1} parent=0 // pred_check_branch
    %29 = sbr.rel (0) target = $region33
  $region32: #{linear_net_forward.1} parent=0 // pred_region
    _
  $region33: #{linear_net_forward.1} parent=0 // pred_fallthru
    _
  // Predicated region
  $region34: #{linear_net_forward.1} parent=0 // pred_check
    _
  $region35: #{linear_net_forward.1} parent=0 // pred_check_branch
    %31 = sbr.rel (0) target = $region37
  $region36: #{linear_net_forward.1} parent=0 // pred_region
    _
  $region37: #{linear_net_forward.1} parent=0 // pred_fallthru
    _
  %v32 = vld [vmem:[%s0] sm:$0xff]
  %v33 = vld [vmem:[%s0 + $0x8] sm:$0xff]
  %v34 = vld [vmem:[%s0 + $0x10] sm:$0xff]
  %v35 = vld [vmem:[%s0 + $0x18] sm:$0xff]
  %v36 = vld [vmem:[%s1] sm:$0xf]
  %v37 = vld [vmem:[%s1 + $0x4] sm:$0xf]
  %v38 = vld [vmem:[%s1 + $0x8] sm:$0xf]
  %v39 = vld [vmem:[%s1 + $0xc] sm:$0xf]
  %v40 = vld [vmem:[%s1 + $0x10] sm:$0xf]
  %v41 = vld [vmem:[%s1 + $0x14] sm:$0xf]
  %v42 = vld [vmem:[%s1 + $0x18] sm:$0xf]
  %v43 = vld [vmem:[%s1 + $0x1c] sm:$0xf]
  %v44 = vld [vmem:[%s1 + $0x20] sm:$0xf]
  %v45 = vld [vmem:[%s1 + $0x24] sm:$0xf]
  %v46 = vld [vmem:[%s1 + $0x28] sm:$0xf]
  %v47 = vld [vmem:[%s1 + $0x2c] sm:$0xf]
  %v48 = vld [vmem:[%s1 + $0x30] sm:$0xf]
  %v49 = vld [vmem:[%s1 + $0x34] sm:$0xf]
  %v50 = vld [vmem:[%s1 + $0x38] sm:$0xf]
  %v51 = vld [vmem:[%s1 + $0x3c] sm:$0xf]
  %v52 = vld [vmem:[%s1 + $0x40] sm:$0xf]
  %v53 = vld [vmem:[%s1 + $0x44] sm:$0xf]
  %v54 = vld [vmem:[%s1 + $0x48] sm:$0xf]
  %v55 = vld [vmem:[%s1 + $0x4c] sm:$0xf]
  %v56 = vld [vmem:[%s1 + $0x50] sm:$0xf]
  %v57 = vld [vmem:[%s1 + $0x54] sm:$0xf]
  %v58 = vld [vmem:[%s1 + $0x58] sm:$0xf]
  %v59 = vld [vmem:[%s1 + $0x5c] sm:$0xf]
  %v60 = vld [vmem:[%s1 + $0x60] sm:$0xf]
  %v61 = vld [vmem:[%s1 + $0x64] sm:$0xf]
  %v62 = vld [vmem:[%s1 + $0x68] sm:$0xf]
  %v63 = vld [vmem:[%s1 + $0x6c] sm:$0xf]
  %v64 = vld [vmem:[%s1 + $0x70] sm:$0xf]
  %v65 = vld [vmem:[%s1 + $0x74] sm:$0xf]
  %v66 = vld [vmem:[%s1 + $0x78] sm:$0xf]
  %v67 = vld [vmem:[%s1 + $0x7c] sm:$0xf]
  %v68 = vld [vmem:[%s1 + $0x80] sm:$0xf]
  %v69 = vld [vmem:[%s1 + $0x84] sm:$0xf]
  %v70 = vld [vmem:[%s1 + $0x88] sm:$0xf]
  %v71 = vld [vmem:[%s1 + $0x8c] sm:$0xf]
  %v72 = vld [vmem:[%s1 + $0x90] sm:$0xf]
  %v73 = vld [vmem:[%s1 + $0x94] sm:$0xf]
  %v74 = vld [vmem:[%s1 + $0x98] sm:$0xf]
  %v75 = vld [vmem:[%s1 + $0x9c] sm:$0xf]
  %v76 = vld [vmem:[%s1 + $0xa0] sm:$0xf]
  %v77 = vld [vmem:[%s1 + $0xa4] sm:$0xf]
  %v78 = vld [vmem:[%s1 + $0xa8] sm:$0xf]
  %v79 = vld [vmem:[%s1 + $0xac] sm:$0xf]
  %v80 = vld [vmem:[%s1 + $0xb0] sm:$0xf]
  %v81 = vld [vmem:[%s1 + $0xb4] sm:$0xf]
  %v82 = vld [vmem:[%s1 + $0xb8] sm:$0xf]
  %v83 = vld [vmem:[%s1 + $0xbc] sm:$0xf]
  %v84 = vld [vmem:[%s1 + $0xc0] sm:$0xf]
  %v85 = vld [vmem:[%s1 + $0xc4] sm:$0xf]
  %v86 = vld [vmem:[%s1 + $0xc8] sm:$0xf]
  %v87 = vld [vmem:[%s1 + $0xcc] sm:$0xf]
  %v88 = vld [vmem:[%s1 + $0xd0] sm:$0xf]
  %v89 = vld [vmem:[%s1 + $0xd4] sm:$0xf]
  %v90 = vld [vmem:[%s1 + $0xd8] sm:$0xf]
  %v91 = vld [vmem:[%s1 + $0xdc] sm:$0xf]
  %v92 = vld [vmem:[%s1 + $0xe0] sm:$0xf]
  %v93 = vld [vmem:[%s1 + $0xe4] sm:$0xf]
  %v94 = vld [vmem:[%s1 + $0xe8] sm:$0xf]
  %v95 = vld [vmem:[%s1 + $0xec] sm:$0xf]
  %v96 = vld [vmem:[%s1 + $0xf0] sm:$0xf]
  %v97 = vld [vmem:[%s1 + $0xf4] sm:$0xf]
  %v98 = vld [vmem:[%s1 + $0xf8] sm:$0xf]
  %v99 = vld [vmem:[%s1 + $0xfc] sm:$0xf]
  %v100 = vld [vmem:[%s1 + $0x100] sm:$0xf]
  %v101 = vld [vmem:[%s1 + $0x104] sm:$0xf]
  %v102 = vld [vmem:[%s1 + $0x108] sm:$0xf]
  %v103 = vld [vmem:[%s1 + $0x10c] sm:$0xf]
  %v104 = vld [vmem:[%s1 + $0x110] sm:$0xf]
  %v105 = vld [vmem:[%s1 + $0x114] sm:$0xf]
  %v106 = vld [vmem:[%s1 + $0x118] sm:$0xf]
  %v107 = vld [vmem:[%s1 + $0x11c] sm:$0xf]
  %v108 = vld [vmem:[%s1 + $0x120] sm:$0xf]
  %v109 = vld [vmem:[%s1 + $0x124] sm:$0xf]
  %v110 = vld [vmem:[%s1 + $0x128] sm:$0xf]
  %v111 = vld [vmem:[%s1 + $0x12c] sm:$0xf]
  %v112 = vld [vmem:[%s1 + $0x130] sm:$0xf]
  %v113 = vld [vmem:[%s1 + $0x134] sm:$0xf]
  %v114 = vld [vmem:[%s1 + $0x138] sm:$0xf]
  %v115 = vld [vmem:[%s1 + $0x13c] sm:$0xf]
  %v116 = vld [vmem:[%s1 + $0x140] sm:$0xf]
  %v117 = vld [vmem:[%s1 + $0x144] sm:$0xf]
  %v118 = vld [vmem:[%s1 + $0x148] sm:$0xf]
  %v119 = vld [vmem:[%s1 + $0x14c] sm:$0xf]
  %v120 = vld [vmem:[%s1 + $0x150] sm:$0xf]
  %v121 = vld [vmem:[%s1 + $0x154] sm:$0xf]
  %v122 = vld [vmem:[%s1 + $0x158] sm:$0xf]
  %v123 = vld [vmem:[%s1 + $0x15c] sm:$0xf]
  %v124 = vld [vmem:[%s1 + $0x160] sm:$0xf]
  %v125 = vld [vmem:[%s1 + $0x164] sm:$0xf]
  %v126 = vld [vmem:[%s1 + $0x168] sm:$0xf]
  %v127 = vld [vmem:[%s1 + $0x16c] sm:$0xf]
  %v128 = vld [vmem:[%s1 + $0x170] sm:$0xf]
  %v129 = vld [vmem:[%s1 + $0x174] sm:$0xf]
  %v130 = vld [vmem:[%s1 + $0x178] sm:$0xf]
  %v131 = vld [vmem:[%s1 + $0x17c] sm:$0xf]
  %v132 = vld [vmem:[%s1 + $0x180] sm:$0xf]
  %v133 = vld [vmem:[%s1 + $0x184] sm:$0xf]
  %v134 = vld [vmem:[%s1 + $0x188] sm:$0xf]
  %v135 = vld [vmem:[%s1 + $0x18c] sm:$0xf]
  %v136 = vld [vmem:[%s1 + $0x190] sm:$0xf]
  %v137 = vld [vmem:[%s1 + $0x194] sm:$0xf]
  %v138 = vld [vmem:[%s1 + $0x198] sm:$0xf]
  %v139 = vld [vmem:[%s1 + $0x19c] sm:$0xf]
  %v140 = vld [vmem:[%s1 + $0x1a0] sm:$0xf]
  %v141 = vld [vmem:[%s1 + $0x1a4] sm:$0xf]
  %v142 = vld [vmem:[%s1 + $0x1a8] sm:$0xf]
  %v143 = vld [vmem:[%s1 + $0x1ac] sm:$0xf]
  %v144 = vld [vmem:[%s1 + $0x1b0] sm:$0xf]
  %v145 = vld [vmem:[%s1 + $0x1b4] sm:$0xf]
  %v146 = vld [vmem:[%s1 + $0x1b8] sm:$0xf]
  %v147 = vld [vmem:[%s1 + $0x1bc] sm:$0xf]
  %v148 = vld [vmem:[%s1 + $0x1c0] sm:$0xf]
  %v149 = vld [vmem:[%s1 + $0x1c4] sm:$0xf]
  %v150 = vld [vmem:[%s1 + $0x1c8] sm:$0xf]
  %v151 = vld [vmem:[%s1 + $0x1cc] sm:$0xf]
  %v152 = vld [vmem:[%s1 + $0x1d0] sm:$0xf]
  %v153 = vld [vmem:[%s1 + $0x1d4] sm:$0xf]
  %v154 = vld [vmem:[%s1 + $0x1d8] sm:$0xf]
  %v155 = vld [vmem:[%s1 + $0x1dc] sm:$0xf]
  %v156 = vld [vmem:[%s1 + $0x1e0] sm:$0xf]
  %v157 = vld [vmem:[%s1 + $0x1e4] sm:$0xf]
  %v158 = vld [vmem:[%s1 + $0x1e8] sm:$0xf]
  %v159 = vld [vmem:[%s1 + $0x1ec] sm:$0xf]
  %v160 = vld [vmem:[%s1 + $0x1f0] sm:$0xf]
  %v161 = vld [vmem:[%s1 + $0x1f4] sm:$0xf]
  %v162 = vld [vmem:[%s1 + $0x1f8] sm:$0xf]
  %v163 = vld [vmem:[%s1 + $0x1fc] sm:$0xf]
  %v164 = vld [vmem:[%s2] sm:$0x1]
  %v166 = vperm.slane %v164, 0
  %v172 = vunpack.c.l.b16 %v32
  %v173 = vunpack.c.h.b16 %v32
  %v174 = vunpack.c.l.b16 %v33
  %v175 = vunpack.c.h.b16 %v33
  %v176 = vunpack.c.l.b16 %v34
  %v177 = vunpack.c.h.b16 %v34
  %v178 = vunpack.c.l.b16 %v35
  %v179 = vunpack.c.h.b16 %v35
  %v180 = vpack.c.b16 %v172, %v172
  %v181 = vpack.c.b16 %v173, %v173
  %v182 = vpack.c.b16 %v174, %v174
  %v183 = vpack.c.b16 %v175, %v175
  %v184 = vpack.c.b16 %v176, %v176
  %v185 = vpack.c.b16 %v177, %v177
  %v186 = vpack.c.b16 %v178, %v178
  %v187 = vpack.c.b16 %v179, %v179
  %v324 = vunpack.c.l.b16 %v36
  %v325 = vunpack.c.l.b16 %v37
  %v326 = vunpack.c.l.b16 %v38
  %v327 = vunpack.c.l.b16 %v39
  %v328 = vunpack.c.l.b16 %v40
  %v329 = vunpack.c.l.b16 %v41
  %v330 = vunpack.c.l.b16 %v42
  %v331 = vunpack.c.l.b16 %v43
  %v332 = vunpack.c.l.b16 %v44
  %v333 = vunpack.c.l.b16 %v45
  %v334 = vunpack.c.l.b16 %v46
  %v335 = vunpack.c.l.b16 %v47
  %v336 = vunpack.c.l.b16 %v48
  %v337 = vunpack.c.l.b16 %v49
  %v338 = vunpack.c.l.b16 %v50
  %v339 = vunpack.c.l.b16 %v51
  %v340 = vunpack.c.l.b16 %v52
  %v341 = vunpack.c.l.b16 %v53
  %v342 = vunpack.c.l.b16 %v54
  %v343 = vunpack.c.l.b16 %v55
  %v344 = vunpack.c.l.b16 %v56
  %v345 = vunpack.c.l.b16 %v57
  %v346 = vunpack.c.l.b16 %v58
  %v347 = vunpack.c.l.b16 %v59
  %v348 = vunpack.c.l.b16 %v60
  %v349 = vunpack.c.l.b16 %v61
  %v350 = vunpack.c.l.b16 %v62
  %v351 = vunpack.c.l.b16 %v63
  %v352 = vunpack.c.l.b16 %v64
  %v353 = vunpack.c.l.b16 %v65
  %v354 = vunpack.c.l.b16 %v66
  %v355 = vunpack.c.l.b16 %v67
  %v356 = vunpack.c.l.b16 %v68
  %v357 = vunpack.c.l.b16 %v69
  %v358 = vunpack.c.l.b16 %v70
  %v359 = vunpack.c.l.b16 %v71
  %v360 = vunpack.c.l.b16 %v72
  %v361 = vunpack.c.l.b16 %v73
  %v362 = vunpack.c.l.b16 %v74
  %v363 = vunpack.c.l.b16 %v75
  %v364 = vunpack.c.l.b16 %v76
  %v365 = vunpack.c.l.b16 %v77
  %v366 = vunpack.c.l.b16 %v78
  %v367 = vunpack.c.l.b16 %v79
  %v368 = vunpack.c.l.b16 %v80
  %v369 = vunpack.c.l.b16 %v81
  %v370 = vunpack.c.l.b16 %v82
  %v371 = vunpack.c.l.b16 %v83
  %v372 = vunpack.c.l.b16 %v84
  %v373 = vunpack.c.l.b16 %v85
  %v374 = vunpack.c.l.b16 %v86
  %v375 = vunpack.c.l.b16 %v87
  %v376 = vunpack.c.l.b16 %v88
  %v377 = vunpack.c.l.b16 %v89
  %v378 = vunpack.c.l.b16 %v90
  %v379 = vunpack.c.l.b16 %v91
  %v380 = vunpack.c.l.b16 %v92
  %v381 = vunpack.c.l.b16 %v93
  %v382 = vunpack.c.l.b16 %v94
  %v383 = vunpack.c.l.b16 %v95
  %v384 = vunpack.c.l.b16 %v96
  %v385 = vunpack.c.l.b16 %v97
  %v386 = vunpack.c.l.b16 %v98
  %v387 = vunpack.c.l.b16 %v99
  %v388 = vunpack.c.l.b16 %v100
  %v389 = vunpack.c.l.b16 %v101
  %v390 = vunpack.c.l.b16 %v102
  %v391 = vunpack.c.l.b16 %v103
  %v392 = vunpack.c.l.b16 %v104
  %v393 = vunpack.c.l.b16 %v105
  %v394 = vunpack.c.l.b16 %v106
  %v395 = vunpack.c.l.b16 %v107
  %v396 = vunpack.c.l.b16 %v108
  %v397 = vunpack.c.l.b16 %v109
  %v398 = vunpack.c.l.b16 %v110
  %v399 = vunpack.c.l.b16 %v111
  %v400 = vunpack.c.l.b16 %v112
  %v401 = vunpack.c.l.b16 %v113
  %v402 = vunpack.c.l.b16 %v114
  %v403 = vunpack.c.l.b16 %v115
  %v404 = vunpack.c.l.b16 %v116
  %v405 = vunpack.c.l.b16 %v117
  %v406 = vunpack.c.l.b16 %v118
  %v407 = vunpack.c.l.b16 %v119
  %v408 = vunpack.c.l.b16 %v120
  %v409 = vunpack.c.l.b16 %v121
  %v410 = vunpack.c.l.b16 %v122
  %v411 = vunpack.c.l.b16 %v123
  %v412 = vunpack.c.l.b16 %v124
  %v413 = vunpack.c.l.b16 %v125
  %v414 = vunpack.c.l.b16 %v126
  %v415 = vunpack.c.l.b16 %v127
  %v416 = vunpack.c.l.b16 %v128
  %v417 = vunpack.c.l.b16 %v129
  %v418 = vunpack.c.l.b16 %v130
  %v419 = vunpack.c.l.b16 %v131
  %v420 = vunpack.c.l.b16 %v132
  %v421 = vunpack.c.l.b16 %v133
  %v422 = vunpack.c.l.b16 %v134
  %v423 = vunpack.c.l.b16 %v135
  %v424 = vunpack.c.l.b16 %v136
  %v425 = vunpack.c.l.b16 %v137
  %v426 = vunpack.c.l.b16 %v138
  %v427 = vunpack.c.l.b16 %v139
  %v428 = vunpack.c.l.b16 %v140
  %v429 = vunpack.c.l.b16 %v141
  %v430 = vunpack.c.l.b16 %v142
  %v431 = vunpack.c.l.b16 %v143
  %v432 = vunpack.c.l.b16 %v144
  %v433 = vunpack.c.l.b16 %v145
  %v434 = vunpack.c.l.b16 %v146
  %v435 = vunpack.c.l.b16 %v147
  %v436 = vunpack.c.l.b16 %v148
  %v437 = vunpack.c.l.b16 %v149
  %v438 = vunpack.c.l.b16 %v150
  %v439 = vunpack.c.l.b16 %v151
  %v440 = vunpack.c.l.b16 %v152
  %v441 = vunpack.c.l.b16 %v153
  %v442 = vunpack.c.l.b16 %v154
  %v443 = vunpack.c.l.b16 %v155
  %v444 = vunpack.c.l.b16 %v156
  %v445 = vunpack.c.l.b16 %v157
  %v446 = vunpack.c.l.b16 %v158
  %v447 = vunpack.c.l.b16 %v159
  %v448 = vunpack.c.l.b16 %v160
  %v449 = vunpack.c.l.b16 %v161
  %v450 = vunpack.c.l.b16 %v162
  %v451 = vunpack.c.l.b16 %v163
  %v452 = vpack.c.b16 %v325, %v324
  %v453 = vpack.c.b16 %v327, %v326
  %v454 = vpack.c.b16 %v329, %v328
  %v455 = vpack.c.b16 %v331, %v330
  %v456 = vpack.c.b16 %v333, %v332
  %v457 = vpack.c.b16 %v335, %v334
  %v458 = vpack.c.b16 %v337, %v336
  %v459 = vpack.c.b16 %v339, %v338
  %v460 = vpack.c.b16 %v341, %v340
  %v461 = vpack.c.b16 %v343, %v342
  %v462 = vpack.c.b16 %v345, %v344
  %v463 = vpack.c.b16 %v347, %v346
  %v464 = vpack.c.b16 %v349, %v348
  %v465 = vpack.c.b16 %v351, %v350
  %v466 = vpack.c.b16 %v353, %v352
  %v467 = vpack.c.b16 %v355, %v354
  %v468 = vpack.c.b16 %v357, %v356
  %v469 = vpack.c.b16 %v359, %v358
  %v470 = vpack.c.b16 %v361, %v360
  %v471 = vpack.c.b16 %v363, %v362
  %v472 = vpack.c.b16 %v365, %v364
  %v473 = vpack.c.b16 %v367, %v366
  %v474 = vpack.c.b16 %v369, %v368
  %v475 = vpack.c.b16 %v371, %v370
  %v476 = vpack.c.b16 %v373, %v372
  %v477 = vpack.c.b16 %v375, %v374
  %v478 = vpack.c.b16 %v377, %v376
  %v479 = vpack.c.b16 %v379, %v378
  %v480 = vpack.c.b16 %v381, %v380
  %v481 = vpack.c.b16 %v383, %v382
  %v482 = vpack.c.b16 %v385, %v384
  %v483 = vpack.c.b16 %v387, %v386
  %v484 = vpack.c.b16 %v389, %v388
  %v485 = vpack.c.b16 %v391, %v390
  %v486 = vpack.c.b16 %v393, %v392
  %v487 = vpack.c.b16 %v395, %v394
  %v488 = vpack.c.b16 %v397, %v396
  %v489 = vpack.c.b16 %v399, %v398
  %v490 = vpack.c.b16 %v401, %v400
  %v491 = vpack.c.b16 %v403, %v402
  %v492 = vpack.c.b16 %v405, %v404
  %v493 = vpack.c.b16 %v407, %v406
  %v494 = vpack.c.b16 %v409, %v408
  %v495 = vpack.c.b16 %v411, %v410
  %v496 = vpack.c.b16 %v413, %v412
  %v497 = vpack.c.b16 %v415, %v414
  %v498 = vpack.c.b16 %v417, %v416
  %v499 = vpack.c.b16 %v419, %v418
  %v500 = vpack.c.b16 %v421, %v420
  %v501 = vpack.c.b16 %v423, %v422
  %v502 = vpack.c.b16 %v425, %v424
  %v503 = vpack.c.b16 %v427, %v426
  %v504 = vpack.c.b16 %v429, %v428
  %v505 = vpack.c.b16 %v431, %v430
  %v506 = vpack.c.b16 %v433, %v432
  %v507 = vpack.c.b16 %v435, %v434
  %v508 = vpack.c.b16 %v437, %v436
  %v509 = vpack.c.b16 %v439, %v438
  %v510 = vpack.c.b16 %v441, %v440
  %v511 = vpack.c.b16 %v443, %v442
  %v512 = vpack.c.b16 %v445, %v444
  %v513 = vpack.c.b16 %v447, %v446
  %v514 = vpack.c.b16 %v449, %v448
  %v515 = vpack.c.b16 %v451, %v450
  %580 = vmatpush.bf16.msra.mxu0 %v459
  %581 = vmatpush.bf16.msra.mxu0 %v458
  %582 = vmatpush.bf16.msra.mxu0 %v457
  %583 = vmatpush.bf16.msra.mxu0 %v456
  %584 = vmatpush.bf16.msra.mxu0 %v455
  %585 = vmatpush.bf16.msra.mxu0 %v454
  %586 = vmatpush.bf16.msra.mxu0 %v453
  %587 = vmatpush.bf16.msra.mxu0 %v452
  %588 = vmatmul.bf16.gmra.mxu0 %v180
  %v589 = vpop.f32.mrf.mxu0
  %v590 = vadd.f32 %v166, %v589
  %v591 = vpop.f32.mrf.mxu0
  %592 = vdwg.mxu0
  %593 = vmatpush.bf16.msra.mxu0 %v467
  %594 = vmatpush.bf16.msra.mxu0 %v466
  %595 = vmatpush.bf16.msra.mxu0 %v465
  %596 = vmatpush.bf16.msra.mxu0 %v464
  %597 = vmatpush.bf16.msra.mxu0 %v463
  %598 = vmatpush.bf16.msra.mxu0 %v462
  %599 = vmatpush.bf16.msra.mxu0 %v461
  %600 = vmatpush.bf16.msra.mxu0 %v460
  %601 = vmatmul.bf16.gmra.mxu0 %v181
  %v602 = vpop.f32.mrf.mxu0
  %v603 = vadd.f32 %v590, %v602
  %v604 = vpop.f32.mrf.mxu0
  %605 = vdwg.mxu0
  %606 = vmatpush.bf16.msra.mxu0 %v475
  %607 = vmatpush.bf16.msra.mxu0 %v474
  %608 = vmatpush.bf16.msra.mxu0 %v473
  %609 = vmatpush.bf16.msra.mxu0 %v472
  %610 = vmatpush.bf16.msra.mxu0 %v471
  %611 = vmatpush.bf16.msra.mxu0 %v470
  %612 = vmatpush.bf16.msra.mxu0 %v469
  %613 = vmatpush.bf16.msra.mxu0 %v468
  %614 = vmatmul.bf16.gmra.mxu0 %v182
  %v615 = vpop.f32.mrf.mxu0
  %v616 = vadd.f32 %v603, %v615
  %v617 = vpop.f32.mrf.mxu0
  %618 = vdwg.mxu0
  %619 = vmatpush.bf16.msra.mxu0 %v483
  %620 = vmatpush.bf16.msra.mxu0 %v482
  %621 = vmatpush.bf16.msra.mxu0 %v481
  %622 = vmatpush.bf16.msra.mxu0 %v480
  %623 = vmatpush.bf16.msra.mxu0 %v479
  %624 = vmatpush.bf16.msra.mxu0 %v478
  %625 = vmatpush.bf16.msra.mxu0 %v477
  %626 = vmatpush.bf16.msra.mxu0 %v476
  %627 = vmatmul.bf16.gmra.mxu0 %v183
  %v628 = vpop.f32.mrf.mxu0
  %v629 = vadd.f32 %v616, %v628
  %v630 = vpop.f32.mrf.mxu0
  %631 = vdwg.mxu0
  %632 = vmatpush.bf16.msra.mxu0 %v491
  %633 = vmatpush.bf16.msra.mxu0 %v490
  %634 = vmatpush.bf16.msra.mxu0 %v489
  %635 = vmatpush.bf16.msra.mxu0 %v488
  %636 = vmatpush.bf16.msra.mxu0 %v487
  %637 = vmatpush.bf16.msra.mxu0 %v486
  %638 = vmatpush.bf16.msra.mxu0 %v485
  %639 = vmatpush.bf16.msra.mxu0 %v484
  %640 = vmatmul.bf16.gmra.mxu0 %v184
  %v641 = vpop.f32.mrf.mxu0
  %v642 = vadd.f32 %v629, %v641
  %v643 = vpop.f32.mrf.mxu0
  %644 = vdwg.mxu0
  %645 = vmatpush.bf16.msra.mxu0 %v499
  %646 = vmatpush.bf16.msra.mxu0 %v498
  %647 = vmatpush.bf16.msra.mxu0 %v497
  %648 = vmatpush.bf16.msra.mxu0 %v496
  %649 = vmatpush.bf16.msra.mxu0 %v495
  %650 = vmatpush.bf16.msra.mxu0 %v494
  %651 = vmatpush.bf16.msra.mxu0 %v493
  %652 = vmatpush.bf16.msra.mxu0 %v492
  %653 = vmatmul.bf16.gmra.mxu0 %v185
  %v654 = vpop.f32.mrf.mxu0
  %v655 = vadd.f32 %v642, %v654
  %v656 = vpop.f32.mrf.mxu0
  %657 = vdwg.mxu0
  %658 = vmatpush.bf16.msra.mxu0 %v507
  %659 = vmatpush.bf16.msra.mxu0 %v506
  %660 = vmatpush.bf16.msra.mxu0 %v505
  %661 = vmatpush.bf16.msra.mxu0 %v504
  %662 = vmatpush.bf16.msra.mxu0 %v503
  %663 = vmatpush.bf16.msra.mxu0 %v502
  %664 = vmatpush.bf16.msra.mxu0 %v501
  %665 = vmatpush.bf16.msra.mxu0 %v500
  %666 = vmatmul.bf16.gmra.mxu0 %v186
  %v667 = vpop.f32.mrf.mxu0
  %v668 = vadd.f32 %v655, %v667
  %v669 = vpop.f32.mrf.mxu0
  %670 = vdwg.mxu0
  %671 = vmatpush.bf16.msra.mxu0 %v515
  %672 = vmatpush.bf16.msra.mxu0 %v514
  %673 = vmatpush.bf16.msra.mxu0 %v513
  %674 = vmatpush.bf16.msra.mxu0 %v512
  %675 = vmatpush.bf16.msra.mxu0 %v511
  %676 = vmatpush.bf16.msra.mxu0 %v510
  %677 = vmatpush.bf16.msra.mxu0 %v509
  %678 = vmatpush.bf16.msra.mxu0 %v508
  %679 = vmatmul.bf16.gmra.mxu0 %v187
  %v680 = vpop.f32.mrf.mxu0
  %v681 = vadd.f32 %v668, %v680
  %v682 = vpop.f32.mrf.mxu0
  %683 = vdwg.mxu0
  %v684 = vtanh.pop %v681
  %v685 = vpack.c.bf16 %v684, %v684
  %v686 = vld [vmem:[%s3] sm:$0xff]
  %v687 = vld [vmem:[%s3 + $0x8] sm:$0xff]
  %v688 = vld [vmem:[%s3 + $0x10] sm:$0xff]
  %v689 = vld [vmem:[%s3 + $0x18] sm:$0xff]
  %v690 = vld [vmem:[%s3 + $0x20] sm:$0xff]
  %v691 = vld [vmem:[%s3 + $0x28] sm:$0xff]
  %v692 = vld [vmem:[%s3 + $0x30] sm:$0xff]
  %v693 = vld [vmem:[%s3 + $0x38] sm:$0xff]
  %v694 = vld [vmem:[%s3 + $0x40] sm:$0xff]
  %v695 = vld [vmem:[%s3 + $0x48] sm:$0xff]
  %v696 = vld [vmem:[%s3 + $0x50] sm:$0xff]
  %v697 = vld [vmem:[%s3 + $0x58] sm:$0xff]
  %v698 = vld [vmem:[%s3 + $0x60] sm:$0xff]
  %v699 = vld [vmem:[%s3 + $0x68] sm:$0xff]
  %v700 = vld [vmem:[%s3 + $0x70] sm:$0xff]
  %v701 = vld [vmem:[%s3 + $0x78] sm:$0xff]
  %v702 = vld [vmem:[%s4] sm:$0x3]
  %v704 = vperm.slane %v702, 0
  %v705 = vperm.slane %v702, 1
  %v724 = vunpack.c.l.b16 %v686
  %v725 = vunpack.c.h.b16 %v686
  %v726 = vunpack.c.l.b16 %v687
  %v727 = vunpack.c.h.b16 %v687
  %v728 = vunpack.c.l.b16 %v688
  %v729 = vunpack.c.h.b16 %v688
  %v730 = vunpack.c.l.b16 %v689
  %v731 = vunpack.c.h.b16 %v689
  %v732 = vunpack.c.l.b16 %v690
  %v733 = vunpack.c.h.b16 %v690
  %v734 = vunpack.c.l.b16 %v691
  %v735 = vunpack.c.h.b16 %v691
  %v736 = vunpack.c.l.b16 %v692
  %v737 = vunpack.c.h.b16 %v692
  %v738 = vunpack.c.l.b16 %v693
  %v739 = vunpack.c.h.b16 %v693
  %v740 = vunpack.c.l.b16 %v694
  %v741 = vunpack.c.h.b16 %v694
  %v742 = vunpack.c.l.b16 %v695
  %v743 = vunpack.c.h.b16 %v695
  %v744 = vunpack.c.l.b16 %v696
  %v745 = vunpack.c.h.b16 %v696
  %v746 = vunpack.c.l.b16 %v697
  %v747 = vunpack.c.h.b16 %v697
  %v748 = vunpack.c.l.b16 %v698
  %v749 = vunpack.c.h.b16 %v698
  %v750 = vunpack.c.l.b16 %v699
  %v751 = vunpack.c.h.b16 %v699
  %v752 = vunpack.c.l.b16 %v700
  %v753 = vunpack.c.h.b16 %v700
  %v754 = vunpack.c.l.b16 %v701
  %v755 = vunpack.c.h.b16 %v701
  %v756 = vpack.c.b16 %v726, %v724
  %v757 = vpack.c.b16 %v727, %v725
  %v758 = vpack.c.b16 %v730, %v728
  %v759 = vpack.c.b16 %v731, %v729
  %v760 = vpack.c.b16 %v734, %v732
  %v761 = vpack.c.b16 %v735, %v733
  %v762 = vpack.c.b16 %v738, %v736
  %v763 = vpack.c.b16 %v739, %v737
  %v764 = vpack.c.b16 %v742, %v740
  %v765 = vpack.c.b16 %v743, %v741
  %v766 = vpack.c.b16 %v746, %v744
  %v767 = vpack.c.b16 %v747, %v745
  %v768 = vpack.c.b16 %v750, %v748
  %v769 = vpack.c.b16 %v751, %v749
  %v770 = vpack.c.b16 %v754, %v752
  %v771 = vpack.c.b16 %v755, %v753
  %788 = vmatpush.bf16.msra.mxu0 %v770
  %789 = vmatpush.bf16.msra.mxu0 %v768
  %790 = vmatpush.bf16.msra.mxu0 %v766
  %791 = vmatpush.bf16.msra.mxu0 %v764
  %792 = vmatpush.bf16.msra.mxu0 %v762
  %793 = vmatpush.bf16.msra.mxu0 %v760
  %794 = vmatpush.bf16.msra.mxu0 %v758
  %795 = vmatpush.bf16.msra.mxu0 %v756
  %796 = vmatmul.bf16.gmra.mxu0 %v685
  %v797 = vpop.f32.mrf.mxu0
  %v798 = vadd.f32 %v704, %v797
  %v799 = vpop.f32.mrf.mxu0
  %800 = vdwg.mxu0
  %801 = vmatpush.bf16.msra.mxu0 %v771
  %802 = vmatpush.bf16.msra.mxu0 %v769
  %803 = vmatpush.bf16.msra.mxu0 %v767
  %804 = vmatpush.bf16.msra.mxu0 %v765
  %805 = vmatpush.bf16.msra.mxu0 %v763
  %806 = vmatpush.bf16.msra.mxu0 %v761
  %807 = vmatpush.bf16.msra.mxu0 %v759
  %808 = vmatpush.bf16.msra.mxu0 %v757
  %809 = vmatmul.bf16.gmra.mxu0 %v685
  %v810 = vpop.f32.mrf.mxu0
  %v811 = vadd.f32 %v705, %v810
  %v812 = vpop.f32.mrf.mxu0
  %813 = vdwg.mxu0
  %v814 = vtanh.pop %v798
  %v815 = vtanh.pop %v811
  %v816 = vpack.c.bf16 %v814, %v814
  %v817 = vpack.c.bf16 %v815, %v815
  %v818 = vld [vmem:[%s5] sm:$0xf]
  %v819 = vld [vmem:[%s5 + $0x4] sm:$0xf]
  %v820 = vld [vmem:[%s5 + $0x8] sm:$0xf]
  %v821 = vld [vmem:[%s5 + $0xc] sm:$0xf]
  %v822 = vld [vmem:[%s5 + $0x10] sm:$0xf]
  %v823 = vld [vmem:[%s5 + $0x14] sm:$0xf]
  %v824 = vld [vmem:[%s5 + $0x18] sm:$0xf]
  %v825 = vld [vmem:[%s5 + $0x1c] sm:$0xf]
  %v826 = vld [vmem:[%s5 + $0x20] sm:$0xf]
  %v827 = vld [vmem:[%s5 + $0x24] sm:$0xf]
  %v828 = vld [vmem:[%s5 + $0x28] sm:$0xf]
  %v829 = vld [vmem:[%s5 + $0x2c] sm:$0xf]
  %v830 = vld [vmem:[%s5 + $0x30] sm:$0xf]
  %v831 = vld [vmem:[%s5 + $0x34] sm:$0xf]
  %v832 = vld [vmem:[%s5 + $0x38] sm:$0xf]
  %v833 = vld [vmem:[%s5 + $0x3c] sm:$0xf]
  %v834 = vld [vmem:[%s5 + $0x40] sm:$0xf]
  %v835 = vld [vmem:[%s5 + $0x44] sm:$0xf]
  %v836 = vld [vmem:[%s5 + $0x48] sm:$0xf]
  %v837 = vld [vmem:[%s5 + $0x4c] sm:$0xf]
  %v838 = vld [vmem:[%s5 + $0x50] sm:$0xf]
  %v839 = vld [vmem:[%s5 + $0x54] sm:$0xf]
  %v840 = vld [vmem:[%s5 + $0x58] sm:$0xf]
  %v841 = vld [vmem:[%s5 + $0x5c] sm:$0xf]
  %v842 = vld [vmem:[%s5 + $0x60] sm:$0xf]
  %v843 = vld [vmem:[%s5 + $0x64] sm:$0xf]
  %v844 = vld [vmem:[%s5 + $0x68] sm:$0xf]
  %v845 = vld [vmem:[%s5 + $0x6c] sm:$0xf]
  %v846 = vld [vmem:[%s5 + $0x70] sm:$0xf]
  %v847 = vld [vmem:[%s5 + $0x74] sm:$0xf]
  %v848 = vld [vmem:[%s5 + $0x78] sm:$0xf]
  %v849 = vld [vmem:[%s5 + $0x7c] sm:$0xf]
  %v850 = vld [vmem:[%s6] sm:$0x1]
  %v852 = vperm.slane %v850, 0
  %v886 = vunpack.c.l.b16 %v818
  %v887 = vunpack.c.l.b16 %v819
  %v888 = vunpack.c.l.b16 %v820
  %v889 = vunpack.c.l.b16 %v821
  %v890 = vunpack.c.l.b16 %v822
  %v891 = vunpack.c.l.b16 %v823
  %v892 = vunpack.c.l.b16 %v824
  %v893 = vunpack.c.l.b16 %v825
  %v894 = vunpack.c.l.b16 %v826
  %v895 = vunpack.c.l.b16 %v827
  %v896 = vunpack.c.l.b16 %v828
  %v897 = vunpack.c.l.b16 %v829
  %v898 = vunpack.c.l.b16 %v830
  %v899 = vunpack.c.l.b16 %v831
  %v900 = vunpack.c.l.b16 %v832
  %v901 = vunpack.c.l.b16 %v833
  %v902 = vunpack.c.l.b16 %v834
  %v903 = vunpack.c.l.b16 %v835
  %v904 = vunpack.c.l.b16 %v836
  %v905 = vunpack.c.l.b16 %v837
  %v906 = vunpack.c.l.b16 %v838
  %v907 = vunpack.c.l.b16 %v839
  %v908 = vunpack.c.l.b16 %v840
  %v909 = vunpack.c.l.b16 %v841
  %v910 = vunpack.c.l.b16 %v842
  %v911 = vunpack.c.l.b16 %v843
  %v912 = vunpack.c.l.b16 %v844
  %v913 = vunpack.c.l.b16 %v845
  %v914 = vunpack.c.l.b16 %v846
  %v915 = vunpack.c.l.b16 %v847
  %v916 = vunpack.c.l.b16 %v848
  %v917 = vunpack.c.l.b16 %v849
  %v918 = vpack.c.b16 %v887, %v886
  %v919 = vpack.c.b16 %v889, %v888
  %v920 = vpack.c.b16 %v891, %v890
  %v921 = vpack.c.b16 %v893, %v892
  %v922 = vpack.c.b16 %v895, %v894
  %v923 = vpack.c.b16 %v897, %v896
  %v924 = vpack.c.b16 %v899, %v898
  %v925 = vpack.c.b16 %v901, %v900
  %v926 = vpack.c.b16 %v903, %v902
  %v927 = vpack.c.b16 %v905, %v904
  %v928 = vpack.c.b16 %v907, %v906
  %v929 = vpack.c.b16 %v909, %v908
  %v930 = vpack.c.b16 %v911, %v910
  %v931 = vpack.c.b16 %v913, %v912
  %v932 = vpack.c.b16 %v915, %v914
  %v933 = vpack.c.b16 %v917, %v916
  %950 = vmatpush.bf16.msra.mxu0 %v925
  %951 = vmatpush.bf16.msra.mxu0 %v924
  %952 = vmatpush.bf16.msra.mxu0 %v923
  %953 = vmatpush.bf16.msra.mxu0 %v922
  %954 = vmatpush.bf16.msra.mxu0 %v921
  %955 = vmatpush.bf16.msra.mxu0 %v920
  %956 = vmatpush.bf16.msra.mxu0 %v919
  %957 = vmatpush.bf16.msra.mxu0 %v918
  %958 = vmatmul.bf16.gmra.mxu0 %v816
  %v959 = vpop.f32.mrf.mxu0
  %v960 = vadd.f32 %v852, %v959
  %v961 = vpop.f32.mrf.mxu0
  %962 = vdwg.mxu0
  %963 = vmatpush.bf16.msra.mxu0 %v933
  %964 = vmatpush.bf16.msra.mxu0 %v932
  %965 = vmatpush.bf16.msra.mxu0 %v931
  %966 = vmatpush.bf16.msra.mxu0 %v930
  %967 = vmatpush.bf16.msra.mxu0 %v929
  %968 = vmatpush.bf16.msra.mxu0 %v928
  %969 = vmatpush.bf16.msra.mxu0 %v927
  %970 = vmatpush.bf16.msra.mxu0 %v926
  %971 = vmatmul.bf16.gmra.mxu0 %v817
  %v972 = vpop.f32.mrf.mxu0
  %v973 = vadd.f32 %v960, %v972
  %v974 = vpop.f32.mrf.mxu0
  %975 = vdwg.mxu0
  %v976 = vtanh.pop %v973
  %v977 = vpack.c.bf16 %v976, %v976
  %v978 = vld [vmem:[%s7] sm:$0xf]
  %v979 = vld [vmem:[%s7 + $0x4] sm:$0xf]
  %v980 = vld [vmem:[%s7 + $0x8] sm:$0xf]
  %v981 = vld [vmem:[%s7 + $0xc] sm:$0xf]
  %v982 = vld [vmem:[%s7 + $0x10] sm:$0xf]
  %v983 = vld [vmem:[%s7 + $0x14] sm:$0xf]
  %v984 = vld [vmem:[%s7 + $0x18] sm:$0xf]
  %v985 = vld [vmem:[%s7 + $0x1c] sm:$0xf]
  %v986 = vld [vmem:[%s7 + $0x20] sm:$0xf]
  %v987 = vld [vmem:[%s7 + $0x24] sm:$0xf]
  %v988 = vld [vmem:[%s7 + $0x28] sm:$0xf]
  %v989 = vld [vmem:[%s7 + $0x2c] sm:$0xf]
  %v990 = vld [vmem:[%s7 + $0x30] sm:$0xf]
  %v991 = vld [vmem:[%s7 + $0x34] sm:$0xf]
  %v992 = vld [vmem:[%s7 + $0x38] sm:$0xf]
  %v993 = vld [vmem:[%s7 + $0x3c] sm:$0xf]
  %v994 = vld [vmem:[%s8] sm:$0x1]
  %v996 = vperm.slane %v994, 0
  %v1014 = vunpack.c.l.b16 %v978
  %v1015 = vunpack.c.l.b16 %v979
  %v1016 = vunpack.c.l.b16 %v980
  %v1017 = vunpack.c.l.b16 %v981
  %v1018 = vunpack.c.l.b16 %v982
  %v1019 = vunpack.c.l.b16 %v983
  %v1020 = vunpack.c.l.b16 %v984
  %v1021 = vunpack.c.l.b16 %v985
  %v1022 = vunpack.c.l.b16 %v986
  %v1023 = vunpack.c.l.b16 %v987
  %v1024 = vunpack.c.l.b16 %v988
  %v1025 = vunpack.c.l.b16 %v989
  %v1026 = vunpack.c.l.b16 %v990
  %v1027 = vunpack.c.l.b16 %v991
  %v1028 = vunpack.c.l.b16 %v992
  %v1029 = vunpack.c.l.b16 %v993
  %v1030 = vpack.c.b16 %v1015, %v1014
  %v1031 = vpack.c.b16 %v1017, %v1016
  %v1032 = vpack.c.b16 %v1019, %v1018
  %v1033 = vpack.c.b16 %v1021, %v1020
  %v1034 = vpack.c.b16 %v1023, %v1022
  %v1035 = vpack.c.b16 %v1025, %v1024
  %v1036 = vpack.c.b16 %v1027, %v1026
  %v1037 = vpack.c.b16 %v1029, %v1028
  %1046 = vmatpush.bf16.msra.mxu0 %v1037
  %1047 = vmatpush.bf16.msra.mxu0 %v1036
  %1048 = vmatpush.bf16.msra.mxu0 %v1035
  %1049 = vmatpush.bf16.msra.mxu0 %v1034
  %1050 = vmatpush.bf16.msra.mxu0 %v1033
  %1051 = vmatpush.bf16.msra.mxu0 %v1032
  %1052 = vmatpush.bf16.msra.mxu0 %v1031
  %1053 = vmatpush.bf16.msra.mxu0 %v1030
  %1054 = vmatmul.bf16.gmra.mxu0 %v977
  %v1055 = vpop.f32.mrf.mxu0
  %v1056 = vadd.f32 %v996, %v1055
  %v1057 = vpop.f32.mrf.mxu0
  %1058 = vdwg.mxu0
  %1059 = vst [vmem:[%s9] sm:$0xff] %v1056
  // Predicated region
  $region38: #{linear_net_forward.1} parent=0 // pred_check
    _
  $region39: #{linear_net_forward.1} parent=0 // pred_check_branch
    %1061 = sbr.rel (0) target = $region41
  $region40: #{linear_net_forward.1} parent=0 // pred_region
    _
  $region41: #{linear_net_forward.1} parent=0 // pred_fallthru
    _
  // Predicated region
  $region42: #{linear_net_forward.1} parent=0 // pred_check
    _
  $region43: #{linear_net_forward.1} parent=0 // pred_check_branch
    %1063 = sbr.rel (0) target = $region45
  $region44: #{linear_net_forward.1} parent=0 // pred_region
    _
  $region45: #{linear_net_forward.1} parent=0 // pred_fallthru
    _

</llo_original>
